<compile_context>
chip_gen: v6e
topology: v6e:2x2x1
jax: 0.10.0
libtpu: 0.0.40
codegen_flags: <defaults>
</compile_context>

<pallas_src>
import math

import jax
import jax.numpy as jnp
from jax.experimental import pallas as pl
from jax.experimental.pallas import tpu as pltpu


def _positive_scale_kernel(x_ref, w_ref, o_ref):
    # x_ref: (block_rows, lane_width); w_ref: (1, lane_width) = softplus(weight)
    # already tiled/cast in the wrapper.  Multiply happens in the promoted
    # dtype of (x, w): f32 when w is f32, native bf16 when w is bf16.
    o_ref[...] = (x_ref[...] * w_ref[...]).astype(o_ref.dtype)


def _vmem_capacity_bytes() -> int:
    try:
        cap = int(getattr(pltpu.get_tpu_info(), "vmem_capacity_bytes", 0))
        if cap > 0:
            return cap
    except Exception:
        pass
    return 64 << 20  # conservative default (v7x per-TC VMEM)


def _sublane_multiple(itemsize: int) -> int:
    # native sublane tile height: 8 for 32-bit, 16 for bf16, 32 for int8/fp8
    return max(8, 32 // max(itemsize, 1))


def _is_v5e() -> bool:
    try:
        kind = jax.devices()[0].device_kind.lower()
    except Exception:
        return False
    return ("v5 lite" in kind) or ("v5e" in kind) or ("v5litepod" in kind)


def _pick_fold(features: int, rows: int, itemsize: int, sub: int,
               vmem_cap: int, lane_target: int = 512) -> int:
    """Fold factor so the folded last dim is a multiple of 128 lanes.

    Never pads: fold must divide `rows` exactly; and the minimal
    (sub x fold*features) tile, double-buffered for x+out, must fit VMEM.
    Otherwise returns 1 (full-extent last dim, masked stores, zero extra traffic).
    """
    if features % 128 == 0 or rows <= 0:
        return 1
    base = math.lcm(features, 128) // features

    def fits(f: int) -> bool:
        return 4 * sub * f * features * itemsize <= vmem_cap // 4

    if rows % base != 0 or not fits(base):
        return 1
    fold = base
    while (fold * 2 * features < lane_target and rows % (fold * 2) == 0
           and fits(fold * 2)):
        fold *= 2
    return fold


def _pick_block_rows(rows_f: int, lane_width: int, itemsize: int,
                     target_tile_bytes: int, sub: int) -> int:
    br = max(sub, (target_tile_bytes // (lane_width * itemsize)) // sub * sub)
    # keep the DMA/compute pipeline busy: >= 8 grid steps (>= 4 per v7x TC)
    # when there are enough rows, otherwise at least 2 steps
    if rows_f >= 8 * sub:
        br = min(br, max(sub, (rows_f // 8) // sub * sub))
    elif rows_f >= 2 * sub:
        br = min(br, max(sub, (rows_f // 2) // sub * sub))
    if br >= rows_f:
        return rows_f
    # prefer an even total step count so both v7x TensorCores stay loaded
    steps = -(-rows_f // br)
    if steps > 1 and steps % 2 == 1:
        br2 = -(-rows_f // (steps + 1))
        br2 = -(-br2 // sub) * sub
        if 0 < br2 <= br:
            br = br2
    return min(br, rows_f)


def positive_scale(inputs: jax.Array, weight: jax.Array, *,
                   block_rows: int | None = None,
                   target_tile_bytes: int | None = None) -> jax.Array:
    """inputs: (..., features), weight: (features,) -> same shape as inputs."""
    features = inputs.shape[-1]
    assert weight.shape == (features,)

    lead_shape = inputs.shape[:-1]
    rows = int(math.prod(lead_shape)) if lead_shape else 1
    itemsize = jnp.dtype(inputs.dtype).itemsize
    sub = _sublane_multiple(itemsize)

    # softplus(weight) once, in f32 (O(features) wrapper work)
    sp = jax.nn.softplus(weight.astype(jnp.float32))

    if rows == 0:
        return inputs  # empty input: nothing to do

    vmem_cap = _vmem_capacity_bytes()
    if target_tile_bytes is None:
        # generation-aware: ~8 MiB tiles on v7x (64 MiB VMEM), ~16 MiB on v5e/v6e
        target_tile_bytes = max(2 << 20, vmem_cap // 8)

    # ---- layout plumbing: lane-dense last dim, only if it is traffic-free ----
    fold = _pick_fold(features, rows, itemsize, sub, vmem_cap)
    lane_width = fold * features

    # escape hatch: if even the minimal tile cannot be double-buffered in VMEM
    # (absurdly large `features`), let plain XLA handle it.
    if 4 * sub * lane_width * itemsize > int(0.6 * vmem_cap):
        return (inputs.astype(jnp.float32) * sp).astype(inputs.dtype)

    rows_f = rows // fold                     # exact by construction (no pad/slice)
    x_folded = inputs.reshape(rows_f, lane_width)   # contiguous: free reshape

    # v6e/v7x VPU has a native bf16 path -> multiply in the input dtype there;
    # f32 inputs and v5e (no bf16 VPU) keep the f32 compute path.
    if inputs.dtype == jnp.float32 or _is_v5e():
        w_dtype = jnp.float32
    else:
        w_dtype = inputs.dtype
    w_folded = jnp.tile(sp, fold).astype(w_dtype).reshape(1, lane_width)

    # ---- tile choice: big lane-dense tiles for a mem-bound elementwise op ----
    if block_rows is None:
        br = _pick_block_rows(rows_f, lane_width, itemsize, target_tile_bytes, sub)
    else:
        br = min(block_rows, rows_f)
        if br < rows_f:
            br = max(sub, (br // sub) * sub)
    grid = (pl.cdiv(rows_f, br),)

    tile_bytes = br * lane_width * itemsize
    # x + out double-buffered, plus the weight row and some margin; never > VMEM
    vmem_limit = 2 * 2 * tile_bytes + 2 * lane_width * 4 + (4 << 20)
    vmem_limit = max(vmem_limit, min(32 << 20, vmem_cap // 2))
    vmem_limit = min(vmem_limit, vmem_cap - (4 << 20))

    cost = pl.CostEstimate(
        flops=rows_f * lane_width,
        transcendentals=0,
        bytes_accessed=2 * rows_f * lane_width * itemsize,
    )

    out_folded = pl.pallas_call(
        _positive_scale_kernel,
        out_shape=jax.ShapeDtypeStruct((rows_f, lane_width), inputs.dtype),
        grid_spec=pltpu.PrefetchScalarGridSpec(
            num_scalar_prefetch=0,
            grid=grid,
            in_specs=[
                pl.BlockSpec((br, lane_width), lambda i: (i, 0)),
                pl.BlockSpec((1, lane_width), lambda i: (0, 0)),
            ],
            out_specs=pl.BlockSpec((br, lane_width), lambda i: (i, 0)),
        ),
        compiler_params=pltpu.CompilerParams(
            dimension_semantics=("parallel",),
            vmem_limit_bytes=int(vmem_limit),
        ),
        cost_estimate=cost,
    )(x_folded, w_folded)

    return out_folded.reshape(inputs.shape)


def make_positive_scale_weight(features: int, init_scale: float = 1.0) -> jax.Array:
    # matches nn.Parameter(torch.ones(features) * log(e**init_scale - 1))
    init_val = math.log(math.pow(math.e, init_scale) - 1.0)
    return jnp.full((features,), init_val, dtype=jnp.float32)


if __name__ == "__main__":
    features = 32
    key = jax.random.PRNGKey(0)
    k1, k2, k3 = jax.random.split(key, 3)

    weight = make_positive_scale_weight(features, init_scale=1.0)
    sp_ref = jax.nn.softplus(weight)

    # (batch, seq, features) f32 — rows divisible by the fold factor (folded path)
    x = jax.random.normal(k1, (2, 8, features), dtype=jnp.float32)
    out = jax.block_until_ready(positive_scale(x, weight))
    assert out.shape == x.shape and out.dtype == x.dtype
    assert jnp.allclose(out, x * sp_ref, atol=1e-6, rtol=1e-6), "mismatch vs reference"

    # ragged row count (15 rows) -> exercises the fold=1 full-extent fallback
    # (no jnp.pad / post-slice HBM round trips)
    y = jax.random.normal(k2, (3, 5, features), dtype=jnp.float32)
    out_y = jax.block_until_ready(positive_scale(y, weight))
    assert out_y.shape == y.shape and out_y.dtype == y.dtype
    assert jnp.allclose(out_y, y * sp_ref, atol=1e-6, rtol=1e-6), "mismatch (ragged)"

    # bf16 path — native bf16 multiply on v6e/v7x, f32 compute kept on v5e
    z = jax.random.normal(k3, (4, 16, features), dtype=jnp.bfloat16)
    out_z = jax.block_until_ready(positive_scale(z, weight))
    ref_z = (z.astype(jnp.float32) * sp_ref).astype(jnp.bfloat16)
    assert out_z.shape == z.shape and out_z.dtype == z.dtype
    assert jnp.allclose(out_z.astype(jnp.float32), ref_z.astype(jnp.float32),
                        atol=2e-2, rtol=2e-2), "mismatch vs reference (bf16)"

    print("KERNEL_OK")
</pallas_src>

<mosaic_0001>
module attributes {stable_mosaic.version = 11 : i64} {
  func.func @_positive_scale_kernel(%arg0: i32, %arg1: memref<2x256xf32, #tpu.memory_space<vmem>>, %arg2: memref<1x256xf32, #tpu.memory_space<vmem>>, %arg3: memref<2x256xf32, #tpu.memory_space<vmem>>) attributes {dimension_semantics = [#tpu.dimension_semantics<parallel>], iteration_bounds = array<i64: 1>, scalar_prefetch = 0 : i64, scratch_operands = 0 : i64, tpu.core_type = #tpu.core_type<tc>, window_params = [{transform_indices = @transform_0, window_bounds = array<i64: 2, 256>}, {pipeline_mode = #tpu.pipeline_mode<synchronous>, transform_indices = @transform_1, window_bounds = array<i64: 1, 256>}, {transform_indices = @transform_2, window_bounds = array<i64: 2, 256>}]} {
    %c0 = arith.constant 0 : index
    %c0_0 = arith.constant 0 : index
    %0 = vector.load %arg1[%c0, %c0_0] : memref<2x256xf32, #tpu.memory_space<vmem>>, vector<2x256xf32>
    %c0_1 = arith.constant 0 : index
    %c0_2 = arith.constant 0 : index
    %1 = vector.load %arg2[%c0_1, %c0_2] : memref<1x256xf32, #tpu.memory_space<vmem>>, vector<1x256xf32>
    %2 = vector.broadcast %1 : vector<1x256xf32> to vector<2x256xf32>
    %3 = arith.mulf %0, %2 : vector<2x256xf32>
    %c0_3 = arith.constant 0 : index
    %c0_4 = arith.constant 0 : index
    %4 = vector.load %arg3[%c0_3, %c0_4] : memref<2x256xf32, #tpu.memory_space<vmem>>, vector<2x256xf32>
    tpu.vector_store %arg3[%c0_3, %c0_4], %3 {strides = array<i32>} : memref<2x256xf32, #tpu.memory_space<vmem>>, vector<2x256xf32>,
    return
  }
  func.func @transform_0(%arg0: i32) -> (i32, i32) {
    %c0_i32 = arith.constant 0 : i32
    %c0_i32_0 = arith.constant 0 : i32
    return %arg0, %c0_i32 : i32, i32
  }
  func.func @transform_1(%arg0: i32) -> (i32, i32) {
    %c0_i32 = arith.constant 0 : i32
    %c0_i32_0 = arith.constant 0 : i32
    %c0_i32_1 = arith.constant 0 : i32
    return %c0_i32, %c0_i32_0 : i32, i32
  }
  func.func @transform_2(%arg0: i32) -> (i32, i32) {
    %c0_i32 = arith.constant 0 : i32
    %c0_i32_0 = arith.constant 0 : i32
    return %arg0, %c0_i32 : i32, i32
  }
}

</mosaic_0001>

<llo_original>
// kernel: tpu_custom_call.1
$region0: #{tpu_custom_call.1}
  #allocation0 [shape = 'u32[]', space=smem, size = 0x4, offset = 0x4, fixed_abs, tag = 'smem constant byte address 0x4 - core index']
  #allocation1 [shape = 'u32[144,128]{1,0:T(1,128)}', space=vmem, size = 0x12000, scoped, tag = 'internal scratch']
  %s0 = inlined_call_operand.hbm [shape: f32[2,256], index: 0, kind: input, shape index: {}]
  %s1 = inlined_call_operand.hbm [shape: f32[1,256], index: 1, kind: input, shape index: {}]
  %s2 = inlined_call_operand.hbm [shape: f32[2,256], index: 2, kind: output, shape index: {}]
  %s3 = sld [smem:[#allocation0]]
  $region26: #{tpu_custom_call.1} parent=0
    _
  %s5 = ssub.s32 1, %s3
  %s6 = scalar_select 0, %s5, %s3
  $region1: #{tpu_custom_call.1} parent=0
    #allocation2 [shape = 'u8[2048]{0}', space=vmem, size = 0x800, scoped, tag = 'input window, operand 0, single buffered']
    #allocation3 [shape = 's32[1]{0}', space=sflag, size = 0x4, scoped, tag = 'scoped memory for tpu_custom_call.1']
    #allocation4 [shape = 's32[1]{0}', space=sflag, size = 0x4, scoped, tag = 'scoped memory for tpu_custom_call.1']
    #allocation5 [shape = 'u8[1024]{0}', space=vmem, size = 0x400, scoped, tag = 'input window, operand 1, single buffered']
    #allocation6 [shape = 's32[1]{0}', space=sflag, size = 0x4, scoped, tag = 'scoped memory for tpu_custom_call.1']
    #allocation7 [shape = 'u8[2048]{0}', space=vmem, size = 0x800, scoped, tag = 'output window, operand 0, single buffered']
    %7 = vsyncpa [#allocation3], 0
    %8 = vsyncpa [#allocation6], 0
    %9 = vsyncpa [#allocation4], 0
    // Predicated region
    $region2: #{tpu_custom_call.1} parent=1 // pred_check
      _
    $region3: #{tpu_custom_call.1} parent=1 // pred_check_branch
      %11 = sbr.rel (0) target = $region5
    $region4: #{tpu_custom_call.1} parent=1 // pred_region
      %s13 = ssub.s32 64, 64
      %14 = vsyncadd [#allocation3], %s13
      %s16 = sshll.u32 [#allocation2], 4
      %s17 = int_to_ptr.vmem [resolvable:$true] %s16
      %19 = dma.hbm_to_vmem [thread:$0]  %s0, 64, %s17, [#allocation3]
    $region5: #{tpu_custom_call.1} parent=1 // pred_fallthru
      _
    // Predicated region
    $region6: #{tpu_custom_call.1} parent=1 // pred_check
      _
    $region7: #{tpu_custom_call.1} parent=1 // pred_check_branch
      %21 = sbr.rel (0) target = $region9
    $region8: #{tpu_custom_call.1} parent=1 // pred_region
      %s23 = ssub.s32 32, 32
      %24 = vsyncadd [#allocation6], %s23
      %s26 = sshll.u32 [#allocation5], 4
      %s27 = int_to_ptr.vmem [resolvable:$true] %s26
      %29 = dma.hbm_to_vmem [thread:$0]  %s1, 32, %s27, [#allocation6]
    $region9: #{tpu_custom_call.1} parent=1 // pred_fallthru
      _
    // Predicated region
    $region10: #{tpu_custom_call.1} parent=1 // pred_check
      _
    $region11: #{tpu_custom_call.1} parent=1 // pred_check_branch
      %31 = sbr.rel (0) target = $region13
    $region12: #{tpu_custom_call.1} parent=1 // pred_region
      %32 = dma.done [#allocation3], 64
    $region13: #{tpu_custom_call.1} parent=1 // pred_fallthru
      _
    // Predicated region
    $region14: #{tpu_custom_call.1} parent=1 // pred_check
      _
    $region15: #{tpu_custom_call.1} parent=1 // pred_check_branch
      %34 = sbr.rel (0) target = $region17
    $region16: #{tpu_custom_call.1} parent=1 // pred_region
      %35 = dma.done [#allocation6], 32
    $region17: #{tpu_custom_call.1} parent=1 // pred_fallthru
      _
    %v36 = vld [vmem:[#allocation2] sm:$0xf]
    %v37 = vld [vmem:[#allocation5] sm:$0x3]
    %v39 = vlaneseq
    %v40 = vshrl.u32 %v39, 7
    %v41 = vsub.s32 0, %v40
    %v42 = vrot.slane %v37, %v41
    %v43 = vlaneseq
    %v44 = vshrl.u32 %v43, 7
    %v45 = vsub.s32 1, %v44
    %v46 = vrot.slane %v37, %v45
    %v47 = vcombine.low %v42, %v46
    %v49 = vunpack.c.l.s4 1983009808
    %v50 = vunpack.c.0.s8 %v49
    %v51 = vlaneseq
    %v52 = vshrl.u32 %v51, 7
    %v53 = vsub.s32 %v50, %v52
    %v54 = vrot.slane %v47, %v53
    %v56 = vmul.f32 %v36, %v54
    %57 = vst [vmem:[#allocation7] sm:$0xf] %v56
    // Predicated region
    $region18: #{tpu_custom_call.1} parent=1 // pred_check
      _
    $region19: #{tpu_custom_call.1} parent=1 // pred_check_branch
      %59 = sbr.rel (0) target = $region21
    $region20: #{tpu_custom_call.1} parent=1 // pred_region
      %s61 = ssub.s32 64, 64
      %62 = vsyncadd [#allocation4], %s61
      %s64 = sshll.u32 [#allocation7], 4
      %s65 = int_to_ptr.vmem [resolvable:$true] %s64
      %67 = dma.vmem_to_hbm [thread:$0]  %s65, 64, %s2, [#allocation4]
    $region21: #{tpu_custom_call.1} parent=1 // pred_fallthru
      _
    // Predicated region
    $region22: #{tpu_custom_call.1} parent=1 // pred_check
      _
    $region23: #{tpu_custom_call.1} parent=1 // pred_check_branch
      %69 = sbr.rel (0) target = $region25
    $region24: #{tpu_custom_call.1} parent=1 // pred_region
      %70 = dma.done [#allocation4], 64
    $region25: #{tpu_custom_call.1} parent=1 // pred_fallthru
      _
    %71 = vsyncpa [#allocation3], 1
    %72 = vsyncpa [#allocation6], 1
    %73 = vsyncpa [#allocation4], 1

</llo_original>
